<compile_context>
chip_gen: v7x
topology: tpu7x:2x2x1
jax: 0.10.0
libtpu: 0.0.40
codegen_flags: <defaults>
</compile_context>

<pallas_src>
import numpy as np
import jax
import jax.numpy as jnp
from jax.experimental import pallas as pl
from jax.experimental.pallas import tpu as pltpu


def _round_up(x, m):
    return ((x + m - 1) // m) * m


# ----------------------------------------------------------------------------
# Host-side filterbank construction (mirrors Sparse_Pitch_Profile.__init__).
# ----------------------------------------------------------------------------
def build_pitch_filters(in_channels, sr, harms_range=24, division=1, norm=False):
    step = 1 / division
    midi_num = np.arange(20.5 - step / 2 - harms_range,
                         108.5 + step + harms_range, step)
    fd = 440 * np.power(2, (midi_num - 69) / 12)
    effected_dim = in_channels // 2 + 1
    x = np.arange(effected_dim)
    freq_f = x * sr / in_channels
    freq_t = sr / x[1:]
    inter_value = np.array([0, 1, 0])
    n_filters = (88 + harms_range) * division

    # ---- frequency-domain filterbank (filter_f) ----
    idxs = np.digitize(freq_f, fd)
    cols, rows, values = [], [], []
    for i in range(harms_range * division, (88 + 2 * harms_range) * division):
        idx = np.where((idxs == i + 1) | (idxs == i + 2))[0]
        c = idx
        r = np.broadcast_to(i - harms_range * division, idx.shape)
        v = np.interp(freq_f[idx], fd[i:i + 3], inter_value).astype(np.float32)
        if norm and len(idx):
            v = v / v.sum()
        if len(idx) == 0 and len(values) and len(values[-1]):
            c = cols[-1].copy()
            r = rows[-1].copy()
            r[:] = i - harms_range * division
            v = values[-1].copy()
        cols.append(np.asarray(c))
        rows.append(np.asarray(r))
        values.append(v)
    rows_f = np.concatenate(rows).astype(np.int64)
    cols_f = np.concatenate(cols).astype(np.int64)
    vals_f = np.concatenate(values).astype(np.float32)
    filter_f = np.zeros((n_filters, effected_dim), np.float32)
    np.add.at(filter_f, (rows_f, cols_f), vals_f)   # COO -> dense (sums dups)

    # ---- time-domain (cepstral) filterbank (filter_t) ----
    idxs = np.digitize(freq_t, fd)
    cols, rows, values = [], [], []
    for i in range((88 + harms_range) * division - 1, -1, -1):
        idx = np.where((idxs == i + 1) | (idxs == i + 2))[0]
        c = idx + 1
        r = np.broadcast_to(i, idx.shape)
        v = np.interp(freq_t[idx], fd[i:i + 3], inter_value).astype(np.float32)
        if norm and len(idx):
            v = v / v.sum()
        if len(idx) == 0 and len(values) and len(values[-1]):
            c = cols[-1].copy()
            r = rows[-1].copy()
            r[:] = i
            v = values[-1].copy()
        cols.append(np.asarray(c))
        rows.append(np.asarray(r))
        values.append(v)
    rows_t = np.concatenate(rows).astype(np.int64)
    cols_t = np.concatenate(cols).astype(np.int64)
    vals_t = np.concatenate(values).astype(np.float32)
    filter_t = np.zeros((n_filters, effected_dim), np.float32)
    np.add.at(filter_t, (rows_t, cols_t), vals_t)

    return filter_f, filter_t, effected_dim, n_filters


# ----------------------------------------------------------------------------
# Pallas kernel: two dense matmuls (ceps @ Wt^T, spec @ Wf^T) on the MXU.
# Activation row blocks stream through the grid; the small padded transposed
# filterbanks are VMEM-resident (constant block index -> no re-DMA per step).
# ----------------------------------------------------------------------------
def _pitch_profile_kernel(ceps_ref, spec_ref, wtT_ref, wfT_ref, ppt_ref, ppf_ref):
    ppt_ref[...] = jnp.dot(ceps_ref[...], wtT_ref[...],
                           preferred_element_type=jnp.float32)
    ppf_ref[...] = jnp.dot(spec_ref[...], wfT_ref[...],
                           preferred_element_type=jnp.float32)


def make_sparse_pitch_profile(filter_f, filter_t, effected_dim, *,
                              trim_output=True):
    """Prepare device-resident filterbanks once; return a jitted forward."""
    filter_f = np.asarray(filter_f, np.float32)
    filter_t = np.asarray(filter_t, np.float32)
    Fn, D = filter_f.shape
    assert D == effected_dim
    F_pad = _round_up(Fn, 128)          # lane-dense outputs -> unmasked stores

    def pad_T(w):                       # (Fn, D) -> (D, F_pad), zero-padded cols
        wp = np.zeros((D, F_pad), np.float32)
        wp[:, :Fn] = w.T
        return jnp.asarray(wp)

    wtT = pad_T(filter_t)               # built once; closed over by the jit
    wfT = pad_T(filter_f)

    @jax.jit
    def forward(ceps, spec):
        if ceps.shape[-1] != effected_dim:
            ceps = ceps[..., :effected_dim]
        if spec.shape[-1] != effected_dim:
            spec = spec[..., :effected_dim]
        B, S, Din = ceps.shape
        assert Din == D
        M = B * S

        # Free reshapes (contiguous); no padding / dtype cast of activations.
        x_t = ceps.reshape(M, D)
        x_f = spec.reshape(M, D)

        # Row tile: big enough to amortize ~0.35 us/grid-step, but >=2 grid
        # steps whenever possible so both v7x TensorCores get work.
        if M >= 16:
            tm = min(1024, _round_up(pl.cdiv(M, 2), 8))
        elif M >= 8:
            tm = 8
        else:
            tm = M                      # tiny case: single block == full dim
        grid = (pl.cdiv(M, tm),)

        itemsize = jnp.dtype(ceps.dtype).itemsize
        cost = pl.CostEstimate(
            flops=4 * M * D * F_pad,                       # two matmuls
            transcendentals=0,
            bytes_accessed=(2 * M * D * itemsize           # activations in
                            + 2 * M * F_pad * 4            # outputs
                            + 2 * D * F_pad * 4),          # weights
        )

        ppt_flat, ppf_flat = pl.pallas_call(
            _pitch_profile_kernel,
            out_shape=(jax.ShapeDtypeStruct((M, F_pad), jnp.float32),
                       jax.ShapeDtypeStruct((M, F_pad), jnp.float32)),
            grid_spec=pltpu.PrefetchScalarGridSpec(
                num_scalar_prefetch=0,
                grid=grid,
                in_specs=[
                    pl.BlockSpec((tm, D), lambda i: (i, 0)),      # ceps rows
                    pl.BlockSpec((tm, D), lambda i: (i, 0)),      # spec rows
                    pl.BlockSpec((D, F_pad), lambda i: (0, 0)),   # filter_t^T
                    pl.BlockSpec((D, F_pad), lambda i: (0, 0)),   # filter_f^T
                ],
                out_specs=[
                    pl.BlockSpec((tm, F_pad), lambda i: (i, 0)),
                    pl.BlockSpec((tm, F_pad), lambda i: (i, 0)),
                ],
            ),
            compiler_params=pltpu.CompilerParams(
                dimension_semantics=("parallel",)),
            cost_estimate=cost,
        )(x_t, x_f, wtT, wfT)

        ppt = ppt_flat.reshape(B, S, F_pad)   # free reshape
        ppf = ppf_flat.reshape(B, S, F_pad)
        if trim_output:
            # One fused slice inside the jit; skip by passing trim_output=False
            # if the consumer tolerates the 112->128 lane padding.
            ppt = ppt[..., :Fn]
            ppf = ppf[..., :Fn]
        return ppt, ppf

    return forward


if __name__ == "__main__":
    # Small, deterministic example consistent with the module.
    in_channels = 256          # "window size"
    sr = 16000                 # sample rate
    harms_range = 24
    division = 1
    batch, steps = 2, 8

    filter_f, filter_t, effected_dim, n_filters = build_pitch_filters(
        in_channels, sr, harms_range=harms_range, division=division, norm=False)

    forward = make_sparse_pitch_profile(filter_f, filter_t, effected_dim)

    key = jax.random.PRNGKey(0)
    k1, k2 = jax.random.split(key)
    # ceps / spec: (batch, steps, effected_dim) float32 (native dtype fed
    # straight to the kernel; pass bf16 here only if the producer emits bf16).
    ceps = jax.random.normal(k1, (batch, steps, effected_dim), dtype=jnp.float32)
    spec = jax.random.normal(k2, (batch, steps, effected_dim), dtype=jnp.float32)

    ppt, ppf = forward(ceps, spec)
    ppt = jax.block_until_ready(ppt)
    ppf = jax.block_until_ready(ppf)

    # Exact (float64 numpy) reference for correctness.
    ceps_np = np.asarray(ceps, np.float64)
    spec_np = np.asarray(spec, np.float64)
    ref_ppt = np.einsum("bsd,fd->bsf", ceps_np, filter_t.astype(np.float64))
    ref_ppf = np.einsum("bsd,fd->bsf", spec_np, filter_f.astype(np.float64))

    assert ppt.shape == (batch, steps, n_filters)
    assert ppf.shape == (batch, steps, n_filters)
    np.testing.assert_allclose(np.asarray(ppt), ref_ppt, rtol=1e-3, atol=1e-3)
    np.testing.assert_allclose(np.asarray(ppf), ref_ppf, rtol=1e-3, atol=1e-3)

    print("KERNEL_OK")
</pallas_src>

<mosaic_0001>
module attributes {stable_mosaic.version = 11 : i64} {
  func.func @_pitch_profile_kernel(%arg0: i32, %arg1: memref<8x129xf32, #tpu.memory_space<vmem>>, %arg2: memref<8x129xf32, #tpu.memory_space<vmem>>, %arg3: memref<129x128xf32, #tpu.memory_space<vmem>>, %arg4: memref<129x128xf32, #tpu.memory_space<vmem>>, %arg5: memref<8x128xf32, #tpu.memory_space<vmem>>, %arg6: memref<8x128xf32, #tpu.memory_space<vmem>>) attributes {dimension_semantics = [#tpu.dimension_semantics<parallel>], iteration_bounds = array<i64: 2>, scalar_prefetch = 0 : i64, scratch_operands = 0 : i64, tpu.core_type = #tpu.core_type<tc>, window_params = [{transform_indices = @transform_0, window_bounds = array<i64: 8, 129>}, {transform_indices = @transform_1, window_bounds = array<i64: 8, 129>}, {pipeline_mode = #tpu.pipeline_mode<synchronous>, transform_indices = @transform_2, window_bounds = array<i64: 129, 128>}, {pipeline_mode = #tpu.pipeline_mode<synchronous>, transform_indices = @transform_3, window_bounds = array<i64: 129, 128>}, {transform_indices = @transform_4, window_bounds = array<i64: 8, 128>}, {transform_indices = @transform_5, window_bounds = array<i64: 8, 128>}]} {
    %c0 = arith.constant 0 : index
    %c0_0 = arith.constant 0 : index
    %0 = vector.load %arg1[%c0, %c0_0] : memref<8x129xf32, #tpu.memory_space<vmem>>, vector<8x129xf32>
    %c0_1 = arith.constant 0 : index
    %c0_2 = arith.constant 0 : index
    %1 = vector.load %arg3[%c0_1, %c0_2] : memref<129x128xf32, #tpu.memory_space<vmem>>, vector<129x128xf32>
    %cst = arith.constant dense<0.000000e+00> : vector<8x128xf32>
    %2 = tpu.matmul %0, %1, %cst {dimension_numbers = #tpu.dot_dimension_numbers<[1], [0], [0], [1], [0, 0, 1, 1], [], []>} : vector<8x129xf32>, vector<129x128xf32>, vector<8x128xf32> -> vector<8x128xf32>
    %c0_3 = arith.constant 0 : index
    %c0_4 = arith.constant 0 : index
    %3 = vector.load %arg5[%c0_3, %c0_4] : memref<8x128xf32, #tpu.memory_space<vmem>>, vector<8x128xf32>
    tpu.vector_store %arg5[%c0_3, %c0_4], %2 {strides = array<i32>} : memref<8x128xf32, #tpu.memory_space<vmem>>, vector<8x128xf32>,
    %c0_5 = arith.constant 0 : index
    %c0_6 = arith.constant 0 : index
    %4 = vector.load %arg2[%c0_5, %c0_6] : memref<8x129xf32, #tpu.memory_space<vmem>>, vector<8x129xf32>
    %c0_7 = arith.constant 0 : index
    %c0_8 = arith.constant 0 : index
    %5 = vector.load %arg4[%c0_7, %c0_8] : memref<129x128xf32, #tpu.memory_space<vmem>>, vector<129x128xf32>
    %cst_9 = arith.constant dense<0.000000e+00> : vector<8x128xf32>
    %6 = tpu.matmul %4, %5, %cst_9 {dimension_numbers = #tpu.dot_dimension_numbers<[1], [0], [0], [1], [0, 0, 1, 1], [], []>} : vector<8x129xf32>, vector<129x128xf32>, vector<8x128xf32> -> vector<8x128xf32>
    %c0_10 = arith.constant 0 : index
    %c0_11 = arith.constant 0 : index
    %7 = vector.load %arg6[%c0_10, %c0_11] : memref<8x128xf32, #tpu.memory_space<vmem>>, vector<8x128xf32>
    tpu.vector_store %arg6[%c0_10, %c0_11], %6 {strides = array<i32>} : memref<8x128xf32, #tpu.memory_space<vmem>>, vector<8x128xf32>,
    return
  }
  func.func @transform_0(%arg0: i32) -> (i32, i32) {
    %c0_i32 = arith.constant 0 : i32
    %c0_i32_0 = arith.constant 0 : i32
    return %arg0, %c0_i32 : i32, i32
  }
  func.func @transform_1(%arg0: i32) -> (i32, i32) {
    %c0_i32 = arith.constant 0 : i32
    %c0_i32_0 = arith.constant 0 : i32
    return %arg0, %c0_i32 : i32, i32
  }
  func.func @transform_2(%arg0: i32) -> (i32, i32) {
    %c0_i32 = arith.constant 0 : i32
    %c0_i32_0 = arith.constant 0 : i32
    %c0_i32_1 = arith.constant 0 : i32
    return %c0_i32, %c0_i32_0 : i32, i32
  }
  func.func @transform_3(%arg0: i32) -> (i32, i32) {
    %c0_i32 = arith.constant 0 : i32
    %c0_i32_0 = arith.constant 0 : i32
    %c0_i32_1 = arith.constant 0 : i32
    return %c0_i32, %c0_i32_0 : i32, i32
  }
  func.func @transform_4(%arg0: i32) -> (i32, i32) {
    %c0_i32 = arith.constant 0 : i32
    %c0_i32_0 = arith.constant 0 : i32
    return %arg0, %c0_i32 : i32, i32
  }
  func.func @transform_5(%arg0: i32) -> (i32, i32) {
    %c0_i32 = arith.constant 0 : i32
    %c0_i32_0 = arith.constant 0 : i32
    return %arg0, %c0_i32 : i32, i32
  }
}

</mosaic_0001>

<llo_original>
// kernel: forward.1
$region0: #{forward.1}
  #allocation0 [shape = 'u32[]', space=smem, size = 0x4, offset = 0x4, fixed_abs, tag = 'smem constant byte address 0x4 - core index']
  #allocation1 [shape = 'u32[144,128]{1,0:T(1,128)}', space=vmem, size = 0x12000, scoped, tag = 'internal scratch']
  %s0 = inlined_call_operand.hbm [shape: f32[16,129], index: 0, kind: input, shape index: {}]
  %s1 = inlined_call_operand.hbm [shape: f32[16,129], index: 1, kind: input, shape index: {}]
  %s2 = inlined_call_operand.hbm [shape: f32[129,128], index: 2, kind: input, shape index: {}]
  %s3 = inlined_call_operand.hbm [shape: f32[129,128], index: 3, kind: input, shape index: {}]
  %s4 = inlined_call_operand.hbm [shape: f32[16,128], index: 4, kind: output, shape index: {0}]
  %s5 = inlined_call_operand.hbm [shape: f32[16,128], index: 5, kind: output, shape index: {1}]
  %6 = xla_tuple %s4, %s5
  %s7 = sld [smem:[#allocation0]]
  $region73: #{forward.1} parent=0
    _
  %s9 = ssub.s32 1, %s7
  %s10 = scalar_select 0, %s9, %s7
  $region1: #{forward.1} parent=0
    #allocation2 [shape = 'u8[16384]{0}', space=vmem, size = 0x4000, scoped, tag = 'input window, operand 0']
    #allocation3 [shape = 's32[2]{0}', space=sflag, size = 0x8, scoped, tag = 'scoped memory for forward.1']
    #allocation4 [shape = 's32[2]{0}', space=sflag, size = 0x8, scoped, tag = 'scoped memory for forward.1']
    #allocation5 [shape = 'u8[16384]{0}', space=vmem, size = 0x4000, scoped, tag = 'input window, operand 1']
    #allocation6 [shape = 's32[2]{0}', space=sflag, size = 0x8, scoped, tag = 'scoped memory for forward.1']
    #allocation7 [shape = 'u8[69632]{0}', space=vmem, size = 0x11000, scoped, tag = 'input window, operand 2, single buffered']
    #allocation8 [shape = 'u8[69632]{0}', space=vmem, size = 0x11000, scoped, tag = 'input window, operand 3, single buffered']
    #allocation9 [shape = 's32[1]{0}', space=sflag, size = 0x4, scoped, tag = 'scoped memory for forward.1']
    #allocation10 [shape = 'u8[8192]{0}', space=vmem, size = 0x2000, scoped, tag = 'output window, operand 0']
    #allocation11 [shape = 'u8[8192]{0}', space=vmem, size = 0x2000, scoped, tag = 'output window, operand 1']
    #allocation12 [shape = 's32[2]{0}', space=sflag, size = 0x8, scoped, tag = 'scoped memory for forward.1']
    %11 = vsyncpa [#allocation3], 0
    %s12 = scalar_lea.sflag [#allocation3], 1
    %13 = vsyncpa %s12, 0
    %14 = vsyncpa [#allocation6], 0
    %s15 = scalar_lea.sflag [#allocation6], 1
    %16 = vsyncpa %s15, 0
    %17 = vsyncpa [#allocation9], 0
    %18 = vsyncpa [#allocation4], 0
    %s19 = scalar_lea.sflag [#allocation4], 1
    %20 = vsyncpa %s19, 0
    %21 = vsyncpa [#allocation12], 0
    %s22 = scalar_lea.sflag [#allocation12], 1
    %23 = vsyncpa %s22, 0
    loop: start=0, step=1, limit=4
    $region2: #{forward.1} parent=1 // loop_pre_header
      _
    $region3: #{forward.1} parent=1 // loop_header
      %s25 = sphi 0, %s29
      %p26 = scmp.ge.s32.totalorder %s25, 4
      %s35 = sphi 0, %s37
      %s38 = sphi 0, %s35
      %s39 = sphi 0, %s38
      %s55 = sphi 0, %s39
      %s61 = sphi 0, %s63
      %s64 = sphi 0, %s61
      %s65 = sphi 0, %s64
      %s81 = sphi 0, %s65
      %s85 = sphi 0, %s85
      %s87 = sphi 0, %s85
      %s88 = sphi 0, %s87
      %s102 = sphi 0, %s88
      %s106 = sphi 0, %s106
      %s108 = sphi 0, %s106
      %s109 = sphi 0, %s108
      %s123 = sphi 0, %s109
      %s129 = sphi 0, %s131
      %s132 = sphi 0, %s129
      %s133 = sphi 0, %s132
      %s149 = sphi 0, %s133
      %s155 = sphi 0, %s157
      %s158 = sphi 0, %s155
      %s159 = sphi 0, %s158
      %s175 = sphi 0, %s159
    $region4: #{forward.1} parent=1 // loop_header_branch
      %28 = sbr.rel (%p26) target = $region8
    $region5: #{forward.1} parent=1 // loop_body
      %s30 = ssub.s32 %s25, 1
      %s31 = ssub.s32 %s25, 2
      %s32 = sadd.s32 %s25, 1
      %s33 = ssub.s32 %s25, %s32
      %p34 = scmp.eq.s32.totalorder %s33, 0
      %s36 = sadd.s32 %s35, 1
      %s37 = scalar_select %p34, %s35, %s36
      %p40 = pneg %p34
      %p41 = scmp.eq.s32.totalorder %s25, 1
      %p42 = por %p40, %p41
      %p43 = scmp.ne.s32.totalorder %s35, %s38
      %p44 = scmp.eq.s32.totalorder %s25, 0
      %p45 = por %p43, %p44
      %p46 = scmp.ne.s32.totalorder %s35, %s38
      %p47 = scmp.eq.s32.totalorder %s30, 1
      %p48 = por %p46, %p47
      %p49 = scmp.ne.s32.totalorder %s38, %s39
      %p50 = scmp.eq.s32.totalorder %s30, 0
      %p51 = por %p49, %p50
      %p52 = scmp.ne.s32.totalorder %s38, %s39
      %p53 = scmp.eq.s32.totalorder %s31, 1
      %p54 = por %p52, %p53
      %p56 = scmp.ne.s32.totalorder %s39, %s55
      %p57 = scmp.eq.s32.totalorder %s31, 0
      %p58 = por %p56, %p57
      %s59 = ssub.s32 %s25, %s32
      %p60 = scmp.eq.s32.totalorder %s59, 0
      %s62 = sadd.s32 %s61, 1
      %s63 = scalar_select %p60, %s61, %s62
      %p66 = pneg %p60
      %p67 = scmp.eq.s32.totalorder %s25, 1
      %p68 = por %p66, %p67
      %p69 = scmp.ne.s32.totalorder %s61, %s64
      %p70 = scmp.eq.s32.totalorder %s25, 0
      %p71 = por %p69, %p70
      %p72 = scmp.ne.s32.totalorder %s61, %s64
      %p73 = scmp.eq.s32.totalorder %s30, 1
      %p74 = por %p72, %p73
      %p75 = scmp.ne.s32.totalorder %s64, %s65
      %p76 = scmp.eq.s32.totalorder %s30, 0
      %p77 = por %p75, %p76
      %p78 = scmp.ne.s32.totalorder %s64, %s65
      %p79 = scmp.eq.s32.totalorder %s31, 1
      %p80 = por %p78, %p79
      %p82 = scmp.ne.s32.totalorder %s65, %s81
      %p83 = scmp.eq.s32.totalorder %s31, 0
      %p84 = por %p82, %p83
      %s86 = sadd.s32 %s85, 1
      %p89 = scmp.eq.s32.totalorder %s25, 1
      %p90 = scmp.ne.s32.totalorder %s85, %s87
      %p91 = scmp.eq.s32.totalorder %s25, 0
      %p92 = por %p90, %p91
      %p93 = scmp.ne.s32.totalorder %s85, %s87
      %p94 = scmp.eq.s32.totalorder %s30, 1
      %p95 = por %p93, %p94
      %p96 = scmp.ne.s32.totalorder %s87, %s88
      %p97 = scmp.eq.s32.totalorder %s30, 0
      %p98 = por %p96, %p97
      %p99 = scmp.ne.s32.totalorder %s87, %s88
      %p100 = scmp.eq.s32.totalorder %s31, 1
      %p101 = por %p99, %p100
      %p103 = scmp.ne.s32.totalorder %s88, %s102
      %p104 = scmp.eq.s32.totalorder %s31, 0
      %p105 = por %p103, %p104
      %s107 = sadd.s32 %s106, 1
      %p110 = scmp.eq.s32.totalorder %s25, 1
      %p111 = scmp.ne.s32.totalorder %s106, %s108
      %p112 = scmp.eq.s32.totalorder %s25, 0
      %p113 = por %p111, %p112
      %p114 = scmp.ne.s32.totalorder %s106, %s108
      %p115 = scmp.eq.s32.totalorder %s30, 1
      %p116 = por %p114, %p115
      %p117 = scmp.ne.s32.totalorder %s108, %s109
      %p118 = scmp.eq.s32.totalorder %s30, 0
      %p119 = por %p117, %p118
      %p120 = scmp.ne.s32.totalorder %s108, %s109
      %p121 = scmp.eq.s32.totalorder %s31, 1
      %p122 = por %p120, %p121
      %p124 = scmp.ne.s32.totalorder %s109, %s123
      %p125 = scmp.eq.s32.totalorder %s31, 0
      %p126 = por %p124, %p125
      %s127 = ssub.s32 %s25, %s32
      %p128 = scmp.eq.s32.totalorder %s127, 0
      %s130 = sadd.s32 %s129, 1
      %s131 = scalar_select %p128, %s129, %s130
      %p134 = pneg %p128
      %p135 = scmp.eq.s32.totalorder %s25, 1
      %p136 = por %p134, %p135
      %p137 = scmp.ne.s32.totalorder %s129, %s132
      %p138 = scmp.eq.s32.totalorder %s25, 0
      %p139 = por %p137, %p138
      %p140 = scmp.ne.s32.totalorder %s129, %s132
      %p141 = scmp.eq.s32.totalorder %s30, 1
      %p142 = por %p140, %p141
      %p143 = scmp.ne.s32.totalorder %s132, %s133
      %p144 = scmp.eq.s32.totalorder %s30, 0
      %p145 = por %p143, %p144
      %p146 = scmp.ne.s32.totalorder %s132, %s133
      %p147 = scmp.eq.s32.totalorder %s31, 1
      %p148 = por %p146, %p147
      %p150 = scmp.ne.s32.totalorder %s133, %s149
      %p151 = scmp.eq.s32.totalorder %s31, 0
      %p152 = por %p150, %p151
      %s153 = ssub.s32 %s25, %s32
      %p154 = scmp.eq.s32.totalorder %s153, 0
      %s156 = sadd.s32 %s155, 1
      %s157 = scalar_select %p154, %s155, %s156
      %p160 = pneg %p154
      %p161 = scmp.eq.s32.totalorder %s25, 1
      %p162 = por %p160, %p161
      %p163 = scmp.ne.s32.totalorder %s155, %s158
      %p164 = scmp.eq.s32.totalorder %s25, 0
      %p165 = por %p163, %p164
      %p166 = scmp.ne.s32.totalorder %s155, %s158
      %p167 = scmp.eq.s32.totalorder %s30, 1
      %p168 = por %p166, %p167
      %p169 = scmp.ne.s32.totalorder %s158, %s159
      %p170 = scmp.eq.s32.totalorder %s30, 0
      %p171 = por %p169, %p170
      %p172 = scmp.ne.s32.totalorder %s158, %s159
      %p173 = scmp.eq.s32.totalorder %s31, 1
      %p174 = por %p172, %p173
      %p176 = scmp.ne.s32.totalorder %s159, %s175
      %p177 = scmp.eq.s32.totalorder %s31, 0
      %p178 = por %p176, %p177
      %p179 = scmp.le.s32.totalorder 1, %s25
      %p180 = scmp.lt.s32.totalorder %s25, 3
      %p181 = pnand %p179, %p180
      %p182 = pneg %p181
      // Predicated region
      $region9: #{forward.1} parent=5 // pred_check
        _
      $region10: #{forward.1} parent=5 // pred_check_branch
        %184 = sbr.rel (%p181) target = $region12
      $region11: #{forward.1} parent=5 // pred_region
        %s185 = ssub.s32 %s25, 1
        // Predicated region
        $region13: #{forward.1} parent=11 // pred_check
          %p186 = pneg %p98
        $region14: #{forward.1} parent=11 // pred_check_branch
          %188 = sbr.rel (%p186) target = $region16
        $region15: #{forward.1} parent=11 // pred_region
          %s190 = ssub.s32 2176, 2176
          %191 = vsyncadd [#allocation6], %s190
          %s192 = sshll.u32 [#allocation7], 4
          %s193 = int_to_ptr.vmem [resolvable:$true] %s192
          %198 = dma.hbm_to_vmem [thread:$0]  %s2, 2176, %s193, [#allocation6], 128, 128, 8
        $region16: #{forward.1} parent=11 // pred_fallthru
          _
        // Predicated region
        $region17: #{forward.1} parent=11 // pred_check
          %p199 = pneg %p119
        $region18: #{forward.1} parent=11 // pred_check_branch
          %201 = sbr.rel (%p199) target = $region20
        $region19: #{forward.1} parent=11 // pred_region
          %s203 = ssub.s32 2176, 2176
          %204 = vsyncadd [#allocation9], %s203
          %s205 = sshll.u32 [#allocation8], 4
          %s206 = int_to_ptr.vmem [resolvable:$true] %s205
          %211 = dma.hbm_to_vmem [thread:$0]  %s3, 2176, %s206, [#allocation9], 128, 128, 8
        $region20: #{forward.1} parent=11 // pred_fallthru
          _
      $region12: #{forward.1} parent=5 // pred_fallthru
        _
      %p212 = scmp.lt.s32.totalorder %s25, 2
      // Predicated region
      $region21: #{forward.1} parent=5 // pred_check
        %p213 = pneg %p212
      $region22: #{forward.1} parent=5 // pred_check_branch
        %215 = sbr.rel (%p213) target = $region24
      $region23: #{forward.1} parent=5 // pred_region
        // Predicated region
        $region25: #{forward.1} parent=23 // pred_check
          %p216 = pneg %p45
        $region26: #{forward.1} parent=23 // pred_check_branch
          %218 = sbr.rel (%p216) target = $region28
        $region27: #{forward.1} parent=23 // pred_region
          %s219 = sand.u32 %s35, 1
          %s220 = scalar_lea.sflag [#allocation3], %s219
          %s221 = sand.u32 %s35, 1
          %s222 = smul.addr %s221, 16
          %s223 = scalar_lea.vmem [#allocation2], %s222
          %s225 = ssub.s32 256, 256
          %226 = vsyncadd %s220, %s225
          %s227 = smul.addr %s25, 2
          %s228 = smul.addr %s227, 128
          %s229 = scalar_lea.hbm %s0, %s228
          %s231 = sshll.u32 %s223, 4
          %s232 = int_to_ptr.vmem [resolvable:$true] %s231
          %234 = dma.hbm_to_vmem [thread:$0]  %s229, 256, %s232, %s220
        $region28: #{forward.1} parent=23 // pred_fallthru
          _
        // Predicated region
        $region29: #{forward.1} parent=23 // pred_check
          %p235 = pneg %p71
        $region30: #{forward.1} parent=23 // pred_check_branch
          %237 = sbr.rel (%p235) target = $region32
        $region31: #{forward.1} parent=23 // pred_region
          %s238 = sand.u32 %s25, 1
          %s239 = scalar_lea.sflag [#allocation6], %s238
          %s240 = sand.u32 %s61, 1
          %s241 = smul.addr %s240, 16
          %s242 = scalar_lea.vmem [#allocation5], %s241
          %s244 = ssub.s32 256, 256
          %245 = vsyncadd %s239, %s244
          %s246 = smul.addr %s25, 2
          %s247 = smul.addr %s246, 128
          %s248 = scalar_lea.hbm %s1, %s247
          %s250 = sshll.u32 %s242, 4
          %s251 = int_to_ptr.vmem [resolvable:$true] %s250
          %253 = dma.hbm_to_vmem [thread:$0]  %s248, 256, %s251, %s239
        $region32: #{forward.1} parent=23 // pred_fallthru
          _
      $region24: #{forward.1} parent=5 // pred_fallthru
        _
      %p254 = scmp.le.s32.totalorder 1, %s25
      %p255 = scmp.lt.s32.totalorder %s25, 3
      %p256 = pnand %p254, %p255
      %p257 = pneg %p256
      // Predicated region
      $region33: #{forward.1} parent=5 // pred_check
        _
      $region34: #{forward.1} parent=5 // pred_check_branch
        %259 = sbr.rel (%p256) target = $region36
      $region35: #{forward.1} parent=5 // pred_region
        %s260 = ssub.s32 %s25, 1
        %s261 = sand.u32 %s38, 1
        %s262 = scalar_lea.sflag [#allocation3], %s261
        %s263 = sand.u32 %s38, 1
        %s264 = smul.addr %s263, 16
        %s265 = scalar_lea.vmem [#allocation2], %s264
        // Predicated region
        $region37: #{forward.1} parent=35 // pred_check
          %p266 = pneg %p51
        $region38: #{forward.1} parent=35 // pred_check_branch
          %268 = sbr.rel (%p266) target = $region40
        $region39: #{forward.1} parent=35 // pred_region
          %269 = dma.done %s262, 256
        $region40: #{forward.1} parent=35 // pred_fallthru
          _
        %s270 = sand.u32 %s30, 1
        %s271 = scalar_lea.sflag [#allocation6], %s270
        %s272 = sand.u32 %s64, 1
        %s273 = smul.addr %s272, 16
        %s274 = scalar_lea.vmem [#allocation5], %s273
        // Predicated region
        $region41: #{forward.1} parent=35 // pred_check
          %p275 = pneg %p77
        $region42: #{forward.1} parent=35 // pred_check_branch
          %277 = sbr.rel (%p275) target = $region44
        $region43: #{forward.1} parent=35 // pred_region
          %278 = dma.done %s271, 256
        $region44: #{forward.1} parent=35 // pred_fallthru
          _
        // Predicated region
        $region45: #{forward.1} parent=35 // pred_check
          %p279 = pneg %p98
        $region46: #{forward.1} parent=35 // pred_check_branch
          %281 = sbr.rel (%p279) target = $region48
        $region47: #{forward.1} parent=35 // pred_region
          %282 = dma.done [#allocation6], 2176
        $region48: #{forward.1} parent=35 // pred_fallthru
          _
        // Predicated region
        $region49: #{forward.1} parent=35 // pred_check
          %p283 = pneg %p119
        $region50: #{forward.1} parent=35 // pred_check_branch
          %285 = sbr.rel (%p283) target = $region52
        $region51: #{forward.1} parent=35 // pred_region
          %286 = dma.done [#allocation9], 2176
        $region52: #{forward.1} parent=35 // pred_fallthru
          _
        %s287 = sand.u32 %s38, 1
        %s288 = scalar_lea.sflag [#allocation3], %s287
        %s289 = sand.u32 %s38, 1
        %s290 = smul.addr %s289, 16
        %s291 = scalar_lea.vmem [#allocation2], %s290
        %p292 = pneg %p51
        %p293 = pneg %p48
        %s294 = sand.u32 %s30, 1
        %s295 = scalar_lea.sflag [#allocation6], %s294
        %s296 = sand.u32 %s64, 1
        %s297 = smul.addr %s296, 16
        %s298 = scalar_lea.vmem [#allocation5], %s297
        %p299 = pneg %p77
        %p300 = pneg %p74
        %p301 = pneg %p98
        %p302 = pneg %p95
        %p303 = pneg %p119
        %p304 = pneg %p116
        %p305 = pneg %p145
        %p306 = pneg %p142
        %s307 = sand.u32 %s132, 1
        %s308 = scalar_lea.sflag [#allocation4], %s307
        %s309 = sand.u32 %s132, 1
        %s310 = smul.addr %s309, 8
        %s311 = scalar_lea.vmem [#allocation10], %s310
        %p312 = pneg %p171
        %p313 = pneg %p168
        %s314 = sand.u32 %s158, 1
        %s315 = scalar_lea.sflag [#allocation12], %s314
        %s316 = sand.u32 %s158, 1
        %s317 = smul.addr %s316, 8
        %s318 = scalar_lea.vmem [#allocation11], %s317
        %v319 = vld [vmem:[%s265] sm:$0xff]
        %v320 = vld [vmem:[%s265 + $0x8] sm:$0xff]
        %v321 = vld [vmem:[#allocation7] sm:$0xff]
        %v322 = vld [vmem:[#allocation7 + $0x8] sm:$0xff]
        %v323 = vld [vmem:[#allocation7 + $0x10] sm:$0xff]
        %v324 = vld [vmem:[#allocation7 + $0x18] sm:$0xff]
        %v325 = vld [vmem:[#allocation7 + $0x20] sm:$0xff]
        %v326 = vld [vmem:[#allocation7 + $0x28] sm:$0xff]
        %v327 = vld [vmem:[#allocation7 + $0x30] sm:$0xff]
        %v328 = vld [vmem:[#allocation7 + $0x38] sm:$0xff]
        %v329 = vld [vmem:[#allocation7 + $0x40] sm:$0xff]
        %v330 = vld [vmem:[#allocation7 + $0x48] sm:$0xff]
        %v331 = vld [vmem:[#allocation7 + $0x50] sm:$0xff]
        %v332 = vld [vmem:[#allocation7 + $0x58] sm:$0xff]
        %v333 = vld [vmem:[#allocation7 + $0x60] sm:$0xff]
        %v334 = vld [vmem:[#allocation7 + $0x68] sm:$0xff]
        %v335 = vld [vmem:[#allocation7 + $0x70] sm:$0xff]
        %v336 = vld [vmem:[#allocation7 + $0x78] sm:$0xff]
        %v337 = vld [vmem:[#allocation7 + $0x80] sm:$0x1]
        %vm338 = vcmask 7168
        %v340 = vsel %vm338, %v320, 0
        %vm342 = vcmask 1040384
        %v344 = vsel %vm342, %v337, 0
        %346 = vmatprep.subr.mxu0 0.0
        %347 = vmatpush1.msra.mxu0 %v321
        %348 = vmatprep.subr.mxu0 0.0
        %349 = vmatpush1.msra.mxu0 %v322
        %350 = vmatprep.subr.mxu0 0.0
        %351 = vmatpush1.msra.mxu0 %v323
        %352 = vmatprep.subr.mxu0 0.0
        %353 = vmatpush1.msra.mxu0 %v324
        %354 = vmatprep.subr.mxu0 0.0
        %355 = vmatpush1.msra.mxu0 %v325
        %356 = vmatprep.subr.mxu0 0.0
        %357 = vmatpush1.msra.mxu0 %v326
        %358 = vmatprep.subr.mxu0 0.0
        %359 = vmatpush1.msra.mxu0 %v327
        %360 = vmatprep.subr.mxu0 0.0
        %361 = vmatpush1.msra.mxu0 %v328
        %362 = vmatprep.subr.mxu0 0.0
        %363 = vmatpush1.msra.mxu0 %v329
        %364 = vmatprep.subr.mxu0 0.0
        %365 = vmatpush1.msra.mxu0 %v330
        %366 = vmatprep.subr.mxu0 0.0
        %367 = vmatpush1.msra.mxu0 %v331
        %368 = vmatprep.subr.mxu0 0.0
        %369 = vmatpush1.msra.mxu0 %v332
        %370 = vmatprep.subr.mxu0 0.0
        %371 = vmatpush1.msra.mxu0 %v333
        %372 = vmatprep.subr.mxu0 0.0
        %373 = vmatpush1.msra.mxu0 %v334
        %374 = vmatprep.subr.mxu0 0.0
        %375 = vmatpush1.msra.mxu0 %v335
        %376 = vmatprep.subr.mxu0 0.0
        %377 = vmatpush1.msra.mxu0 %v336
        %378 = vmatprep.subr.mxu0 0.0
        %379 = vmatpush1.msra.mxu0 %v344
        %380 = vmatprep.subr.mxu0 0.0
        %381 = vmatpush1.msra.mxu0 0.0
        %382 = vmatprep.subr.mxu0 0.0
        %383 = vmatpush1.msra.mxu0 0.0
        %384 = vmatprep.subr.mxu0 0.0
        %385 = vmatpush1.msra.mxu0 0.0
        %386 = vmatprep.subr.mxu0 0.0
        %387 = vmatpush1.msra.mxu0 0.0
        %388 = vmatprep.subr.mxu0 0.0
        %389 = vmatpush1.msra.mxu0 0.0
        %390 = vmatprep.subr.mxu0 0.0
        %391 = vmatpush1.msra.mxu0 0.0
        %392 = vmatprep.subr.mxu0 0.0
        %393 = vmatpush1.msra.mxu0 0.0
        %394 = vmatprep.subr.mxu0 0.0
        %395 = vmatpush1.msra.mxu0 0.0
        %396 = vmatprep.subr.mxu0 0.0
        %397 = vmatpush1.msra.mxu0 0.0
        %398 = vmatprep.subr.mxu0 0.0
        %399 = vmatpush1.msra.mxu0 0.0
        %400 = vmatprep.subr.mxu0 0.0
        %401 = vmatpush1.msra.mxu0 0.0
        %402 = vmatprep.subr.mxu0 0.0
        %403 = vmatpush1.msra.mxu0 0.0
        %404 = vmatprep.subr.mxu0 0.0
        %405 = vmatpush1.msra.mxu0 0.0
        %406 = vmatprep.subr.mxu0 0.0
        %407 = vmatpush1.msra.mxu0 0.0
        %408 = vmatprep.subr.mxu0 0.0
        %409 = vmatpush1.msra.mxu0 0.0
        %410 = vmatprep.mubr.f32.mxu0 %v340
        %411 = vmatmul.mubr.f32.gmra.mrb[0].mxu0 %v319
        %v412 = vpop.f32.mrb[0].mxu0
        %v413 = vadd.f32 0.0, %v412
        %v414 = vpop.f32.mrb[0].mxu0
        %415 = vdwg.mxu0
        %416 = vst [vmem:[%s311] sm:$0xff] %v413
        %v417 = vld [vmem:[%s274] sm:$0xff]
        %v418 = vld [vmem:[%s274 + $0x8] sm:$0xff]
        %v419 = vld [vmem:[#allocation8] sm:$0xff]
        %v420 = vld [vmem:[#allocation8 + $0x8] sm:$0xff]
        %v421 = vld [vmem:[#allocation8 + $0x10] sm:$0xff]
        %v422 = vld [vmem:[#allocation8 + $0x18] sm:$0xff]
        %v423 = vld [vmem:[#allocation8 + $0x20] sm:$0xff]
        %v424 = vld [vmem:[#allocation8 + $0x28] sm:$0xff]
        %v425 = vld [vmem:[#allocation8 + $0x30] sm:$0xff]
        %v426 = vld [vmem:[#allocation8 + $0x38] sm:$0xff]
        %v427 = vld [vmem:[#allocation8 + $0x40] sm:$0xff]
        %v428 = vld [vmem:[#allocation8 + $0x48] sm:$0xff]
        %v429 = vld [vmem:[#allocation8 + $0x50] sm:$0xff]
        %v430 = vld [vmem:[#allocation8 + $0x58] sm:$0xff]
        %v431 = vld [vmem:[#allocation8 + $0x60] sm:$0xff]
        %v432 = vld [vmem:[#allocation8 + $0x68] sm:$0xff]
        %v433 = vld [vmem:[#allocation8 + $0x70] sm:$0xff]
        %v434 = vld [vmem:[#allocation8 + $0x78] sm:$0xff]
        %v435 = vld [vmem:[#allocation8 + $0x80] sm:$0x1]
        %v437 = vsel %vm338, %v418, 0
        %v440 = vsel %vm342, %v435, 0
        %442 = vmatprep.subr.mxu0 0.0
        %443 = vmatpush1.msra.mxu0 %v419
        %444 = vmatprep.subr.mxu0 0.0
        %445 = vmatpush1.msra.mxu0 %v420
        %446 = vmatprep.subr.mxu0 0.0
        %447 = vmatpush1.msra.mxu0 %v421
        %448 = vmatprep.subr.mxu0 0.0
        %449 = vmatpush1.msra.mxu0 %v422
        %450 = vmatprep.subr.mxu0 0.0
        %451 = vmatpush1.msra.mxu0 %v423
        %452 = vmatprep.subr.mxu0 0.0
        %453 = vmatpush1.msra.mxu0 %v424
        %454 = vmatprep.subr.mxu0 0.0
        %455 = vmatpush1.msra.mxu0 %v425
        %456 = vmatprep.subr.mxu0 0.0
        %457 = vmatpush1.msra.mxu0 %v426
        %458 = vmatprep.subr.mxu0 0.0
        %459 = vmatpush1.msra.mxu0 %v427
        %460 = vmatprep.subr.mxu0 0.0
        %461 = vmatpush1.msra.mxu0 %v428
        %462 = vmatprep.subr.mxu0 0.0
        %463 = vmatpush1.msra.mxu0 %v429
        %464 = vmatprep.subr.mxu0 0.0
        %465 = vmatpush1.msra.mxu0 %v430
        %466 = vmatprep.subr.mxu0 0.0
        %467 = vmatpush1.msra.mxu0 %v431
        %468 = vmatprep.subr.mxu0 0.0
        %469 = vmatpush1.msra.mxu0 %v432
        %470 = vmatprep.subr.mxu0 0.0
        %471 = vmatpush1.msra.mxu0 %v433
        %472 = vmatprep.subr.mxu0 0.0
        %473 = vmatpush1.msra.mxu0 %v434
        %474 = vmatprep.subr.mxu0 0.0
        %475 = vmatpush1.msra.mxu0 %v440
        %476 = vmatprep.subr.mxu0 0.0
        %477 = vmatpush1.msra.mxu0 0.0
        %478 = vmatprep.subr.mxu0 0.0
        %479 = vmatpush1.msra.mxu0 0.0
        %480 = vmatprep.subr.mxu0 0.0
        %481 = vmatpush1.msra.mxu0 0.0
        %482 = vmatprep.subr.mxu0 0.0
        %483 = vmatpush1.msra.mxu0 0.0
        %484 = vmatprep.subr.mxu0 0.0
        %485 = vmatpush1.msra.mxu0 0.0
        %486 = vmatprep.subr.mxu0 0.0
        %487 = vmatpush1.msra.mxu0 0.0
        %488 = vmatprep.subr.mxu0 0.0
        %489 = vmatpush1.msra.mxu0 0.0
        %490 = vmatprep.subr.mxu0 0.0
        %491 = vmatpush1.msra.mxu0 0.0
        %492 = vmatprep.subr.mxu0 0.0
        %493 = vmatpush1.msra.mxu0 0.0
        %494 = vmatprep.subr.mxu0 0.0
        %495 = vmatpush1.msra.mxu0 0.0
        %496 = vmatprep.subr.mxu0 0.0
        %497 = vmatpush1.msra.mxu0 0.0
        %498 = vmatprep.subr.mxu0 0.0
        %499 = vmatpush1.msra.mxu0 0.0
        %500 = vmatprep.subr.mxu0 0.0
        %501 = vmatpush1.msra.mxu0 0.0
        %502 = vmatprep.subr.mxu0 0.0
        %503 = vmatpush1.msra.mxu0 0.0
        %504 = vmatprep.subr.mxu0 0.0
        %505 = vmatpush1.msra.mxu0 0.0
        %506 = vmatprep.mubr.f32.mxu0 %v437
        %507 = vmatmul.mubr.f32.gmra.mrb[0].mxu0 %v417
        %v508 = vpop.f32.mrb[0].mxu0
        %v509 = vadd.f32 0.0, %v508
        %v510 = vpop.f32.mrb[0].mxu0
        %511 = vdwg.mxu0
        %512 = vst [vmem:[%s318] sm:$0xff] %v509
        %s513 = sand.u32 %s132, 1
        %s514 = scalar_lea.sflag [#allocation4], %s513
        %s515 = sand.u32 %s132, 1
        %s516 = smul.addr %s515, 8
        %s517 = scalar_lea.vmem [#allocation10], %s516
        %s518 = sand.u32 %s158, 1
        %s519 = scalar_lea.sflag [#allocation12], %s518
        %s520 = sand.u32 %s158, 1
        %s521 = smul.addr %s520, 8
        %s522 = scalar_lea.vmem [#allocation11], %s521
        // Predicated region
        $region53: #{forward.1} parent=35 // pred_check
          %p523 = pneg %p142
        $region54: #{forward.1} parent=35 // pred_check_branch
          %525 = sbr.rel (%p523) target = $region56
        $region55: #{forward.1} parent=35 // pred_region
          %s527 = ssub.s32 128, 128
          %528 = vsyncadd %s514, %s527
          %s529 = smul.addr %s30, 128
          %s530 = scalar_lea.hbm %s4, %s529
          %s532 = sshll.u32 %s517, 4
          %s533 = int_to_ptr.vmem [resolvable:$true] %s532
          %535 = dma.vmem_to_hbm [thread:$0]  %s533, 128, %s530, %s514
        $region56: #{forward.1} parent=35 // pred_fallthru
          _
        // Predicated region
        $region57: #{forward.1} parent=35 // pred_check
          %p536 = pneg %p168
        $region58: #{forward.1} parent=35 // pred_check_branch
          %538 = sbr.rel (%p536) target = $region60
        $region59: #{forward.1} parent=35 // pred_region
          %s540 = ssub.s32 128, 128
          %541 = vsyncadd %s519, %s540
          %s542 = smul.addr %s30, 128
          %s543 = scalar_lea.hbm %s5, %s542
          %s545 = sshll.u32 %s522, 4
          %s546 = int_to_ptr.vmem [resolvable:$true] %s545
          %548 = dma.vmem_to_hbm [thread:$0]  %s546, 128, %s543, %s519
        $region60: #{forward.1} parent=35 // pred_fallthru
          _
      $region36: #{forward.1} parent=5 // pred_fallthru
        _
      %p549 = scmp.le.s32.totalorder 2, %s25
      // Predicated region
      $region61: #{forward.1} parent=5 // pred_check
        %p550 = pneg %p549
      $region62: #{forward.1} parent=5 // pred_check_branch
        %552 = sbr.rel (%p550) target = $region64
      $region63: #{forward.1} parent=5 // pred_region
        %s553 = ssub.s32 %s25, 2
        // Predicated region
        $region65: #{forward.1} parent=63 // pred_check
          %p554 = pneg %p148
        $region66: #{forward.1} parent=63 // pred_check_branch
          %556 = sbr.rel (%p554) target = $region68
        $region67: #{forward.1} parent=63 // pred_region
          %s557 = sand.u32 %s133, 1
          %s558 = scalar_lea.sflag [#allocation4], %s557
          %s559 = sand.u32 %s133, 1
          %s560 = smul.addr %s559, 8
          %s561 = scalar_lea.vmem [#allocation10], %s560
          %562 = dma.done %s558, 128
        $region68: #{forward.1} parent=63 // pred_fallthru
          _
        // Predicated region
        $region69: #{forward.1} parent=63 // pred_check
          %p563 = pneg %p174
        $region70: #{forward.1} parent=63 // pred_check_branch
          %565 = sbr.rel (%p563) target = $region72
        $region71: #{forward.1} parent=63 // pred_region
          %s566 = sand.u32 %s159, 1
          %s567 = scalar_lea.sflag [#allocation12], %s566
          %s568 = sand.u32 %s159, 1
          %s569 = smul.addr %s568, 8
          %s570 = scalar_lea.vmem [#allocation11], %s569
          %571 = dma.done %s567, 128
        $region72: #{forward.1} parent=63 // pred_fallthru
          _
      $region64: #{forward.1} parent=5 // pred_fallthru
        _
    $region6: #{forward.1} parent=1 // loop_footer
      %s29 = sadd.s32 1, %s25
    $region7: #{forward.1} parent=1 // loop_footer_branch
      %24 = sbr.rel target = $region3
    $region8: #{forward.1} parent=1 // loop_exit
      _
    %572 = vsyncpa [#allocation3], 1
    %s573 = scalar_lea.sflag [#allocation3], 1
    %574 = vsyncpa %s573, 1
    %575 = vsyncpa [#allocation6], 1
    %s576 = scalar_lea.sflag [#allocation6], 1
    %577 = vsyncpa %s576, 1
    %578 = vsyncpa [#allocation9], 1
    %579 = vsyncpa [#allocation4], 1
    %s580 = scalar_lea.sflag [#allocation4], 1
    %581 = vsyncpa %s580, 1
    %582 = vsyncpa [#allocation12], 1
    %s583 = scalar_lea.sflag [#allocation12], 1
    %584 = vsyncpa %s583, 1

</llo_original>
